<compile_context>
chip_gen: v7x
topology: tpu7x:2x2x1
jax: 0.10.0
libtpu: 0.0.40
codegen_flags: <defaults>
</compile_context>

<pallas_src>
import functools
import math

import jax
import jax.numpy as jnp
from jax.experimental import pallas as pl
from jax.experimental.pallas import tpu as pltpu


def _round_up(x, m):
    return ((x + m - 1) // m) * m


# --------------------------------------------------------------------------- #
# Pallas prediction-head kernel (row-tiled, fused class+coord head, tight outputs)
# --------------------------------------------------------------------------- #
def _pet_head_kernel(hs_ref, wf_ref, bf_ref, w2_ref, b2_ref, w3_ref, b3_ref,
                     logits_ref, off_ref, *, hidden, ncls):
    # f32 HBM read; bf16 cast in-register (hides under the MXU push).
    h = hs_ref[...].astype(jnp.bfloat16)                               # (TM, D)

    # Fused [coord-MLP layer 0 | class_embed] matmul: one MXU push, f32 accumulate.
    t = jnp.dot(h, wf_ref[...], preferred_element_type=jnp.float32) + bf_ref[...]
    logits_ref[...] = t[:, hidden:hidden + ncls]                       # class head (tight write)
    x = jnp.maximum(t[:, :hidden], 0.0)                                # ReLU (hidden layer 0)

    # coord-MLP layer 1 (ReLU) and layer 2 (linear; weights pre-scaled by 0.5).
    x = jnp.maximum(
        jnp.dot(x.astype(jnp.bfloat16), w2_ref[...],
                preferred_element_type=jnp.float32) + b2_ref[...], 0.0)
    c = jnp.dot(x.astype(jnp.bfloat16), w3_ref[...],
                preferred_element_type=jnp.float32) + b3_ref[...]

    # (sigmoid(2c) - 0.5) * 2 == tanh(c); the 0.5 was folded into w3/b3 -> single EUP tanh.
    off_ref[...] = jnp.tanh(c)


def pet_head(hs, params, *, tile_rows=4096):
    """hs: (L, B, N, D) f32. Returns (logits (L,B,N,ncls), offsets (L,B,N,2))."""
    L, B, N, D = hs.shape
    wc, bc, w1, b1, w2, b2, w3, b3 = params
    ncls = wc.shape[1]

    # Fold class head into the first coord matmul; cast MXU weight operands to bf16 once.
    # Keep wf at D+ncls lanes (258 at D=256) -- no extra lane padding beyond that.
    wf = jnp.concatenate([w1, wc], axis=1).astype(jnp.bfloat16)        # (D, D+ncls)
    bf = jnp.concatenate([b1, bc], axis=1)                             # (1, D+ncls) f32
    w2b = w2.astype(jnp.bfloat16)
    w3b = (0.5 * w3).astype(jnp.bfloat16)                              # fold sigmoid->tanh scale
    b3h = 0.5 * b3

    # Head is pointwise over rows -> flatten (L,B,N,D) into rows and tile rows.
    rows = L * B * N
    tm = min(_round_up(tile_rows, 128), _round_up(rows, 128))
    grid = (pl.cdiv(rows, tm),)                                        # ragged tail tile masked by Pallas
    hs_rows = hs.reshape(rows, D)                                      # no pad / no cast pass over hs

    def weight_spec(arr):
        # Constant index_map -> fetched once, revisited every grid step (no re-DMA).
        # TODO(synk): pipeline_mode=pl.Buffered(1) would drop the unused 2nd buffer; skipped
        # since the weights are <0.5 MiB and it buys nothing at these sizes.
        return pl.BlockSpec(arr.shape, lambda i: (0, 0))

    kernel = functools.partial(_pet_head_kernel, hidden=D, ncls=ncls)
    # VMEM (double-buffered): tm*D*4 B (hs f32) + tiny outputs + ~weights; tm=4096,D=256 -> ~8.5 MiB.
    logits, offsets = pl.pallas_call(
        kernel,
        out_shape=(jax.ShapeDtypeStruct((rows, ncls), jnp.float32),
                   jax.ShapeDtypeStruct((rows, 2), jnp.float32)),
        grid_spec=pltpu.PrefetchScalarGridSpec(
            num_scalar_prefetch=0,
            grid=grid,
            in_specs=[
                pl.BlockSpec((tm, D), lambda i: (i, 0)),               # hs row tile (f32)
                weight_spec(wf), weight_spec(bf),
                weight_spec(w2b), weight_spec(b2),
                weight_spec(w3b), weight_spec(b3h),
            ],
            out_specs=[pl.BlockSpec((tm, ncls), lambda i: (i, 0)),     # tight logits
                       pl.BlockSpec((tm, 2), lambda i: (i, 0))],       # tight offsets
        ),
        # TODO(synk): on v7x (2 TensorCores) switch the row axis to pltpu.CORE_PARALLEL to
        # shard row tiles across cores; "parallel" is the portable choice for v5e/v6e.
        compiler_params=pltpu.CompilerParams(dimension_semantics=("parallel",)),
    )(hs_rows, wf, bf, w2b, b2, w3b, b3h)

    return logits.reshape(L, B, N, ncls), offsets.reshape(L, B, N, 2)


# --------------------------------------------------------------------------- #
# BasePETCount forward (train path, predict='origin', sparse quadtree layer)
# --------------------------------------------------------------------------- #
def base_pet_count_forward(samples, dense_input_embed, src, params, *,
                           pq_stride=8, num_dec_layers=2, tile_rows=4096,
                           aux_head=False):
    B, _, H, W = samples.shape
    C = dense_input_embed.shape[1]
    s = pq_stride

    # ---- get_point_query / points_queris_embed (training path) ----
    gh = (H + s // 2 - 1) // s
    gw = (W + s // 2 - 1) // s
    N = gh * gw

    shift_y = ((jnp.arange(gh) + 0.5) * s).astype(jnp.int32)
    shift_x = ((jnp.arange(gw) + 0.5) * s).astype(jnp.int32)
    yy, xx = jnp.meshgrid(shift_y, shift_x, indexing="ij")
    points_queries = jnp.stack([yy.flatten(), xx.flatten()], axis=1)      # (N, 2) = (y, x)

    # The point grid is regular -> the torch fancy-index gathers are strided slices.
    q_embed = dense_input_embed[:, :, s // 2::s, s // 2::s][:, :, :gh, :gw]   # (B, C, gh, gw)
    q_feats = src[:, :, :gh, :gw]                                             # (B, C, gh, gw)
    q_embed_bnc = jnp.transpose(q_embed.reshape(B, C, N), (0, 2, 1))          # (B, N, C)
    q_feats_bnc = jnp.transpose(q_feats.reshape(B, C, N), (0, 2, 1))          # (B, N, C)

    # TODO(synk): backbone/transformer are external modules injected into BasePETCount;
    # stubbed as per-layer-scaled (query_embed + query_feats) so decoder layers are
    # distinct activations (no identical broadcast copies pushed through HBM).
    base = (q_embed_bnc + q_feats_bnc).astype(jnp.float32)                    # (B, N, C)
    layer_scale = 1.0 + jnp.arange(num_dec_layers, dtype=jnp.float32) / num_dec_layers
    hs = base[None] * layer_scale[:, None, None, None]                        # (L, B, N, C)

    # ---- predict() : origin path, training (no 'test' in kwargs) ----
    img_h, img_w = float(H), float(W)
    pq_norm = points_queries.astype(jnp.float32) / jnp.array([img_h, img_w], jnp.float32)

    # Returned dict only consumes layer -1; run the head on the last layer only unless
    # per-layer (aux-loss) predictions are requested.
    head_hs = hs if aux_head else hs[-1:]
    outputs_class, outputs_offsets = pet_head(head_hs, params, tile_rows=tile_rows)
    # outputs_points = outputs_offsets[-1] + points_queries (normalized), broadcast on batch
    outputs_points = outputs_offsets[-1] + pq_norm[None]

    out = {
        "pred_logits": outputs_class[-1],          # (B, N, num_classes+1)
        "pred_points": outputs_points,             # (B, N, 2)
        "img_shape": (H, W),
        "pred_offsets": outputs_offsets[-1],       # (B, N, 2)
        "points_queries": pq_norm,                 # normalized, as mutated in-place in torch
        "pq_stride": pq_stride,
    }
    return out, hs, pq_norm


# --------------------------------------------------------------------------- #
# Deterministic parameter init (mimics nn.Linear default: U(-1/sqrt(fan_in), ..))
# --------------------------------------------------------------------------- #
def init_linear(key, fan_in, fan_out):
    kw, kb = jax.random.split(key)
    bound = 1.0 / math.sqrt(fan_in)
    w = jax.random.uniform(kw, (fan_in, fan_out), jnp.float32, -bound, bound)
    b = jax.random.uniform(kb, (1, fan_out), jnp.float32, -bound, bound)
    return w, b


def reference_head(hs, pq_norm, params):
    """Pure-JAX reference of predict() ('origin', train) with the same bf16 operand
    quantization the Pallas kernel applies to its MXU inputs (f32 accumulation)."""
    wc, bc, w1, b1, w2, b2, w3, b3 = params
    q = lambda a: a.astype(jnp.bfloat16).astype(jnp.float32)
    h = q(hs)
    logits = h @ q(wc) + bc
    x = jax.nn.relu(h @ q(w1) + b1)
    x = jax.nn.relu(q(x) @ q(w2) + b2)
    offsets = (jax.nn.sigmoid(q(x) @ q(w3) + b3) - 0.5) * 2.0
    points = offsets[-1] + pq_norm
    return logits[-1], offsets[-1], points


if __name__ == "__main__":
    # Small deterministic config
    B, D = 2, 32                 # batch, hidden_dim
    H, W = 64, 64                # image size
    num_classes = 1              # -> class head outputs num_classes + 1 = 2
    pq_stride = 8                # sparse_stride
    L = 2                        # synthetic decoder depth

    key = jax.random.PRNGKey(0)
    k_img, k_embed, k_src, k_cls, k_m1, k_m2, k_m3 = jax.random.split(key, 7)

    samples = jax.random.normal(k_img, (B, 3, H, W), jnp.float32)
    dense_input_embed = jax.random.normal(k_embed, (B, D, H, W), jnp.float32)
    src = jax.random.normal(k_src, (B, D, H // pq_stride, W // pq_stride), jnp.float32)

    wc, bc = init_linear(k_cls, D, num_classes + 1)      # class_embed
    w1, b1 = init_linear(k_m1, D, D)                     # coord_embed layer 0
    w2, b2 = init_linear(k_m2, D, D)                     # coord_embed layer 1
    w3, b3 = init_linear(k_m3, D, 2)                     # coord_embed layer 2
    params = (wc, bc, w1, b1, w2, b2, w3, b3)

    # aux_head=True + tile_rows=128 keeps the toy problem small while still exercising a
    # multi-step grid (rows = L*B*N = 256 -> 2 parallel row tiles of 128).
    out, hs, pq_norm = base_pet_count_forward(
        samples, dense_input_embed, src, params,
        pq_stride=pq_stride, num_dec_layers=L, tile_rows=128, aux_head=True)
    jax.block_until_ready(out["pred_points"])

    # correctness check against a pure-JAX reference of the prediction head
    ref_logits, ref_offsets, ref_points = reference_head(hs, pq_norm, params)
    assert jnp.allclose(out["pred_logits"], ref_logits, atol=1e-2, rtol=1e-2)
    assert jnp.allclose(out["pred_offsets"], ref_offsets, atol=1e-2, rtol=1e-2)
    assert jnp.allclose(out["pred_points"], ref_points, atol=1e-2, rtol=1e-2)

    print("KERNEL_OK")
</pallas_src>

<mosaic_0001>
module attributes {stable_mosaic.version = 11 : i64} {
  func.func @_pet_head_kernel(%arg0: i32, %arg1: memref<128x32xf32, #tpu.memory_space<vmem>>, %arg2: memref<32x34xbf16, #tpu.memory_space<vmem>>, %arg3: memref<1x34xf32, #tpu.memory_space<vmem>>, %arg4: memref<32x32xbf16, #tpu.memory_space<vmem>>, %arg5: memref<1x32xf32, #tpu.memory_space<vmem>>, %arg6: memref<32x2xbf16, #tpu.memory_space<vmem>>, %arg7: memref<1x2xf32, #tpu.memory_space<vmem>>, %arg8: memref<128x2xf32, #tpu.memory_space<vmem>>, %arg9: memref<128x2xf32, #tpu.memory_space<vmem>>) attributes {dimension_semantics = [#tpu.dimension_semantics<parallel>], iteration_bounds = array<i64: 2>, scalar_prefetch = 0 : i64, scratch_operands = 0 : i64, tpu.core_type = #tpu.core_type<tc>, window_params = [{transform_indices = @transform_0, window_bounds = array<i64: 128, 32>}, {pipeline_mode = #tpu.pipeline_mode<synchronous>, transform_indices = @transform_1, window_bounds = array<i64: 32, 34>}, {pipeline_mode = #tpu.pipeline_mode<synchronous>, transform_indices = @transform_2, window_bounds = array<i64: 1, 34>}, {pipeline_mode = #tpu.pipeline_mode<synchronous>, transform_indices = @transform_3, window_bounds = array<i64: 32, 32>}, {pipeline_mode = #tpu.pipeline_mode<synchronous>, transform_indices = @transform_4, window_bounds = array<i64: 1, 32>}, {pipeline_mode = #tpu.pipeline_mode<synchronous>, transform_indices = @transform_5, window_bounds = array<i64: 32, 2>}, {pipeline_mode = #tpu.pipeline_mode<synchronous>, transform_indices = @transform_6, window_bounds = array<i64: 1, 2>}, {transform_indices = @transform_7, window_bounds = array<i64: 128, 2>}, {transform_indices = @transform_8, window_bounds = array<i64: 128, 2>}]} {
    %c0 = arith.constant 0 : index
    %c0_0 = arith.constant 0 : index
    %0 = vector.load %arg1[%c0, %c0_0] : memref<128x32xf32, #tpu.memory_space<vmem>>, vector<128x32xf32>
    %1 = arith.truncf %0 : vector<128x32xf32> to vector<128x32xbf16>
    %c0_1 = arith.constant 0 : index
    %c0_2 = arith.constant 0 : index
    %2 = vector.load %arg2[%c0_1, %c0_2] : memref<32x34xbf16, #tpu.memory_space<vmem>>, vector<32x34xbf16>
    %cst = arith.constant dense<0.000000e+00> : vector<128x34xf32>
    %3 = tpu.matmul %1, %2, %cst {dimension_numbers = #tpu.dot_dimension_numbers<[1], [0], [0], [1], [0, 0, 1, 1], [], []>} : vector<128x32xbf16>, vector<32x34xbf16>, vector<128x34xf32> -> vector<128x34xf32>
    %c0_3 = arith.constant 0 : index
    %c0_4 = arith.constant 0 : index
    %4 = vector.load %arg3[%c0_3, %c0_4] : memref<1x34xf32, #tpu.memory_space<vmem>>, vector<1x34xf32>
    %5 = vector.broadcast %4 : vector<1x34xf32> to vector<128x34xf32>
    %6 = arith.addf %3, %5 : vector<128x34xf32>
    %7 = vector.extract_strided_slice %6 {offsets = [0, 32], sizes = [128, 2], strides = [1, 1]} : vector<128x34xf32> to vector<128x2xf32>
    %c0_5 = arith.constant 0 : index
    %c0_6 = arith.constant 0 : index
    %8 = vector.load %arg8[%c0_5, %c0_6] : memref<128x2xf32, #tpu.memory_space<vmem>>, vector<128x2xf32>
    tpu.vector_store %arg8[%c0_5, %c0_6], %7 {strides = array<i32>} : memref<128x2xf32, #tpu.memory_space<vmem>>, vector<128x2xf32>,
    %9 = vector.extract_strided_slice %6 {offsets = [0, 0], sizes = [128, 32], strides = [1, 1]} : vector<128x34xf32> to vector<128x32xf32>
    %cst_7 = arith.constant 0.000000e+00 : f32
    %10 = vector.broadcast %cst_7 : f32 to vector<128x32xf32>
    %11 = arith.maximumf %9, %10 : vector<128x32xf32>
    %12 = arith.truncf %11 : vector<128x32xf32> to vector<128x32xbf16>
    %c0_8 = arith.constant 0 : index
    %c0_9 = arith.constant 0 : index
    %13 = vector.load %arg4[%c0_8, %c0_9] : memref<32x32xbf16, #tpu.memory_space<vmem>>, vector<32x32xbf16>
    %cst_10 = arith.constant dense<0.000000e+00> : vector<128x32xf32>
    %14 = tpu.matmul %12, %13, %cst_10 {dimension_numbers = #tpu.dot_dimension_numbers<[1], [0], [0], [1], [0, 0, 1, 1], [], []>} : vector<128x32xbf16>, vector<32x32xbf16>, vector<128x32xf32> -> vector<128x32xf32>
    %c0_11 = arith.constant 0 : index
    %c0_12 = arith.constant 0 : index
    %15 = vector.load %arg5[%c0_11, %c0_12] : memref<1x32xf32, #tpu.memory_space<vmem>>, vector<1x32xf32>
    %16 = vector.broadcast %15 : vector<1x32xf32> to vector<128x32xf32>
    %17 = arith.addf %14, %16 : vector<128x32xf32>
    %cst_13 = arith.constant 0.000000e+00 : f32
    %18 = vector.broadcast %cst_13 : f32 to vector<128x32xf32>
    %19 = arith.maximumf %17, %18 : vector<128x32xf32>
    %20 = arith.truncf %19 : vector<128x32xf32> to vector<128x32xbf16>
    %c0_14 = arith.constant 0 : index
    %c0_15 = arith.constant 0 : index
    %21 = vector.load %arg6[%c0_14, %c0_15] : memref<32x2xbf16, #tpu.memory_space<vmem>>, vector<32x2xbf16>
    %cst_16 = arith.constant dense<0.000000e+00> : vector<128x2xf32>
    %22 = tpu.matmul %20, %21, %cst_16 {dimension_numbers = #tpu.dot_dimension_numbers<[1], [0], [0], [1], [0, 0, 1, 1], [], []>} : vector<128x32xbf16>, vector<32x2xbf16>, vector<128x2xf32> -> vector<128x2xf32>
    %c0_17 = arith.constant 0 : index
    %c0_18 = arith.constant 0 : index
    %23 = vector.load %arg7[%c0_17, %c0_18] : memref<1x2xf32, #tpu.memory_space<vmem>>, vector<1x2xf32>
    %24 = vector.broadcast %23 : vector<1x2xf32> to vector<128x2xf32>
    %25 = arith.addf %22, %24 : vector<128x2xf32>
    %26 = math.tanh %25 : vector<128x2xf32>
    %c0_19 = arith.constant 0 : index
    %c0_20 = arith.constant 0 : index
    %27 = vector.load %arg9[%c0_19, %c0_20] : memref<128x2xf32, #tpu.memory_space<vmem>>, vector<128x2xf32>
    tpu.vector_store %arg9[%c0_19, %c0_20], %26 {strides = array<i32>} : memref<128x2xf32, #tpu.memory_space<vmem>>, vector<128x2xf32>,
    return
  }
  func.func @transform_0(%arg0: i32) -> (i32, i32) {
    %c0_i32 = arith.constant 0 : i32
    %c0_i32_0 = arith.constant 0 : i32
    return %arg0, %c0_i32 : i32, i32
  }
  func.func @transform_1(%arg0: i32) -> (i32, i32) {
    %c0_i32 = arith.constant 0 : i32
    %c0_i32_0 = arith.constant 0 : i32
    %c0_i32_1 = arith.constant 0 : i32
    return %c0_i32, %c0_i32_0 : i32, i32
  }
  func.func @transform_2(%arg0: i32) -> (i32, i32) {
    %c0_i32 = arith.constant 0 : i32
    %c0_i32_0 = arith.constant 0 : i32
    %c0_i32_1 = arith.constant 0 : i32
    return %c0_i32, %c0_i32_0 : i32, i32
  }
  func.func @transform_3(%arg0: i32) -> (i32, i32) {
    %c0_i32 = arith.constant 0 : i32
    %c0_i32_0 = arith.constant 0 : i32
    %c0_i32_1 = arith.constant 0 : i32
    return %c0_i32, %c0_i32_0 : i32, i32
  }
  func.func @transform_4(%arg0: i32) -> (i32, i32) {
    %c0_i32 = arith.constant 0 : i32
    %c0_i32_0 = arith.constant 0 : i32
    %c0_i32_1 = arith.constant 0 : i32
    return %c0_i32, %c0_i32_0 : i32, i32
  }
  func.func @transform_5(%arg0: i32) -> (i32, i32) {
    %c0_i32 = arith.constant 0 : i32
    %c0_i32_0 = arith.constant 0 : i32
    %c0_i32_1 = arith.constant 0 : i32
    return %c0_i32, %c0_i32_0 : i32, i32
  }
  func.func @transform_6(%arg0: i32) -> (i32, i32) {
    %c0_i32 = arith.constant 0 : i32
    %c0_i32_0 = arith.constant 0 : i32
    %c0_i32_1 = arith.constant 0 : i32
    return %c0_i32, %c0_i32_0 : i32, i32
  }
  func.func @transform_7(%arg0: i32) -> (i32, i32) {
    %c0_i32 = arith.constant 0 : i32
    %c0_i32_0 = arith.constant 0 : i32
    return %arg0, %c0_i32 : i32, i32
  }
  func.func @transform_8(%arg0: i32) -> (i32, i32) {
    %c0_i32 = arith.constant 0 : i32
    %c0_i32_0 = arith.constant 0 : i32
    return %arg0, %c0_i32 : i32, i32
  }
}

</mosaic_0001>

<llo_original>
// kernel: tpu_custom_call.1
$region0: #{tpu_custom_call.1}
  #allocation0 [shape = 'u32[]', space=smem, size = 0x4, offset = 0x4, fixed_abs, tag = 'smem constant byte address 0x4 - core index']
  #allocation1 [shape = 'u32[144,128]{1,0:T(1,128)}', space=vmem, size = 0x12000, scoped, tag = 'internal scratch']
  %s0 = inlined_call_operand.vmem [shape: f32[256,32], index: 0, kind: input, shape index: {}]
  %s1 = inlined_call_operand.vmem [shape: bf16[32,34], index: 1, kind: input, shape index: {}]
  %s2 = inlined_call_operand.vmem [shape: f32[1,34], index: 2, kind: input, shape index: {}]
  %s3 = inlined_call_operand.vmem [shape: bf16[32,32], index: 3, kind: input, shape index: {}]
  %s4 = inlined_call_operand.vmem [shape: f32[1,32], index: 4, kind: input, shape index: {}]
  %s5 = inlined_call_operand.vmem [shape: bf16[32,2], index: 5, kind: input, shape index: {}]
  %s6 = inlined_call_operand.vmem [shape: f32[1,2], index: 6, kind: input, shape index: {}]
  %s7 = inlined_call_operand.vmem [shape: f32[256,2], index: 7, kind: output, shape index: {0}]
  %s8 = inlined_call_operand.vmem [shape: f32[256,2], index: 8, kind: output, shape index: {1}]
  %9 = xla_tuple %s7, %s8
  %s10 = sld [smem:[#allocation0]]
  $region69: #{tpu_custom_call.1} parent=0
    _
  %s12 = ssub.s32 1, %s10
  %s13 = scalar_select 0, %s12, %s10
  loop: start=0, step=1, limit=4
  $region2: #{tpu_custom_call.1} parent=0 // loop_pre_header
    _
  $region3: #{tpu_custom_call.1} parent=0 // loop_header
    %s15 = sphi 0, %s19
    %p16 = scmp.ge.s32.totalorder %s15, 4
    %s25 = sphi 0, %s27
    %s28 = sphi 0, %s25
    %s29 = sphi 0, %s28
    %s45 = sphi 0, %s29
    %s49 = sphi 0, %s49
    %s51 = sphi 0, %s49
    %s52 = sphi 0, %s51
    %s66 = sphi 0, %s52
    %s70 = sphi 0, %s70
    %s72 = sphi 0, %s70
    %s73 = sphi 0, %s72
    %s87 = sphi 0, %s73
    %s91 = sphi 0, %s91
    %s93 = sphi 0, %s91
    %s94 = sphi 0, %s93
    %s108 = sphi 0, %s94
    %s112 = sphi 0, %s112
    %s114 = sphi 0, %s112
    %s115 = sphi 0, %s114
    %s129 = sphi 0, %s115
    %s133 = sphi 0, %s133
    %s135 = sphi 0, %s133
    %s136 = sphi 0, %s135
    %s150 = sphi 0, %s136
    %s154 = sphi 0, %s154
    %s156 = sphi 0, %s154
    %s157 = sphi 0, %s156
    %s171 = sphi 0, %s157
    %s177 = sphi 0, %s179
    %s180 = sphi 0, %s177
    %s181 = sphi 0, %s180
    %s197 = sphi 0, %s181
    %s203 = sphi 0, %s205
    %s206 = sphi 0, %s203
    %s207 = sphi 0, %s206
    %s223 = sphi 0, %s207
  $region4: #{tpu_custom_call.1} parent=0 // loop_header_branch
    %18 = sbr.rel (%p16) target = $region8
  $region5: #{tpu_custom_call.1} parent=0 // loop_body
    %s20 = ssub.s32 %s15, 1
    %s21 = ssub.s32 %s15, 2
    %s22 = sadd.s32 %s15, 1
    %s23 = ssub.s32 %s15, %s22
    %p24 = scmp.eq.s32.totalorder %s23, 0
    %s26 = sadd.s32 %s25, 1
    %s27 = scalar_select %p24, %s25, %s26
    %p30 = pneg %p24
    %p31 = scmp.eq.s32.totalorder %s15, 1
    %p32 = por %p30, %p31
    %p33 = scmp.ne.s32.totalorder %s25, %s28
    %p34 = scmp.eq.s32.totalorder %s15, 0
    %p35 = por %p33, %p34
    %p36 = scmp.ne.s32.totalorder %s25, %s28
    %p37 = scmp.eq.s32.totalorder %s20, 1
    %p38 = por %p36, %p37
    %p39 = scmp.ne.s32.totalorder %s28, %s29
    %p40 = scmp.eq.s32.totalorder %s20, 0
    %p41 = por %p39, %p40
    %p42 = scmp.ne.s32.totalorder %s28, %s29
    %p43 = scmp.eq.s32.totalorder %s21, 1
    %p44 = por %p42, %p43
    %p46 = scmp.ne.s32.totalorder %s29, %s45
    %p47 = scmp.eq.s32.totalorder %s21, 0
    %p48 = por %p46, %p47
    %s50 = sadd.s32 %s49, 1
    %p53 = scmp.eq.s32.totalorder %s15, 1
    %p54 = scmp.ne.s32.totalorder %s49, %s51
    %p55 = scmp.eq.s32.totalorder %s15, 0
    %p56 = por %p54, %p55
    %p57 = scmp.ne.s32.totalorder %s49, %s51
    %p58 = scmp.eq.s32.totalorder %s20, 1
    %p59 = por %p57, %p58
    %p60 = scmp.ne.s32.totalorder %s51, %s52
    %p61 = scmp.eq.s32.totalorder %s20, 0
    %p62 = por %p60, %p61
    %p63 = scmp.ne.s32.totalorder %s51, %s52
    %p64 = scmp.eq.s32.totalorder %s21, 1
    %p65 = por %p63, %p64
    %p67 = scmp.ne.s32.totalorder %s52, %s66
    %p68 = scmp.eq.s32.totalorder %s21, 0
    %p69 = por %p67, %p68
    %s71 = sadd.s32 %s70, 1
    %p74 = scmp.eq.s32.totalorder %s15, 1
    %p75 = scmp.ne.s32.totalorder %s70, %s72
    %p76 = scmp.eq.s32.totalorder %s15, 0
    %p77 = por %p75, %p76
    %p78 = scmp.ne.s32.totalorder %s70, %s72
    %p79 = scmp.eq.s32.totalorder %s20, 1
    %p80 = por %p78, %p79
    %p81 = scmp.ne.s32.totalorder %s72, %s73
    %p82 = scmp.eq.s32.totalorder %s20, 0
    %p83 = por %p81, %p82
    %p84 = scmp.ne.s32.totalorder %s72, %s73
    %p85 = scmp.eq.s32.totalorder %s21, 1
    %p86 = por %p84, %p85
    %p88 = scmp.ne.s32.totalorder %s73, %s87
    %p89 = scmp.eq.s32.totalorder %s21, 0
    %p90 = por %p88, %p89
    %s92 = sadd.s32 %s91, 1
    %p95 = scmp.eq.s32.totalorder %s15, 1
    %p96 = scmp.ne.s32.totalorder %s91, %s93
    %p97 = scmp.eq.s32.totalorder %s15, 0
    %p98 = por %p96, %p97
    %p99 = scmp.ne.s32.totalorder %s91, %s93
    %p100 = scmp.eq.s32.totalorder %s20, 1
    %p101 = por %p99, %p100
    %p102 = scmp.ne.s32.totalorder %s93, %s94
    %p103 = scmp.eq.s32.totalorder %s20, 0
    %p104 = por %p102, %p103
    %p105 = scmp.ne.s32.totalorder %s93, %s94
    %p106 = scmp.eq.s32.totalorder %s21, 1
    %p107 = por %p105, %p106
    %p109 = scmp.ne.s32.totalorder %s94, %s108
    %p110 = scmp.eq.s32.totalorder %s21, 0
    %p111 = por %p109, %p110
    %s113 = sadd.s32 %s112, 1
    %p116 = scmp.eq.s32.totalorder %s15, 1
    %p117 = scmp.ne.s32.totalorder %s112, %s114
    %p118 = scmp.eq.s32.totalorder %s15, 0
    %p119 = por %p117, %p118
    %p120 = scmp.ne.s32.totalorder %s112, %s114
    %p121 = scmp.eq.s32.totalorder %s20, 1
    %p122 = por %p120, %p121
    %p123 = scmp.ne.s32.totalorder %s114, %s115
    %p124 = scmp.eq.s32.totalorder %s20, 0
    %p125 = por %p123, %p124
    %p126 = scmp.ne.s32.totalorder %s114, %s115
    %p127 = scmp.eq.s32.totalorder %s21, 1
    %p128 = por %p126, %p127
    %p130 = scmp.ne.s32.totalorder %s115, %s129
    %p131 = scmp.eq.s32.totalorder %s21, 0
    %p132 = por %p130, %p131
    %s134 = sadd.s32 %s133, 1
    %p137 = scmp.eq.s32.totalorder %s15, 1
    %p138 = scmp.ne.s32.totalorder %s133, %s135
    %p139 = scmp.eq.s32.totalorder %s15, 0
    %p140 = por %p138, %p139
    %p141 = scmp.ne.s32.totalorder %s133, %s135
    %p142 = scmp.eq.s32.totalorder %s20, 1
    %p143 = por %p141, %p142
    %p144 = scmp.ne.s32.totalorder %s135, %s136
    %p145 = scmp.eq.s32.totalorder %s20, 0
    %p146 = por %p144, %p145
    %p147 = scmp.ne.s32.totalorder %s135, %s136
    %p148 = scmp.eq.s32.totalorder %s21, 1
    %p149 = por %p147, %p148
    %p151 = scmp.ne.s32.totalorder %s136, %s150
    %p152 = scmp.eq.s32.totalorder %s21, 0
    %p153 = por %p151, %p152
    %s155 = sadd.s32 %s154, 1
    %p158 = scmp.eq.s32.totalorder %s15, 1
    %p159 = scmp.ne.s32.totalorder %s154, %s156
    %p160 = scmp.eq.s32.totalorder %s15, 0
    %p161 = por %p159, %p160
    %p162 = scmp.ne.s32.totalorder %s154, %s156
    %p163 = scmp.eq.s32.totalorder %s20, 1
    %p164 = por %p162, %p163
    %p165 = scmp.ne.s32.totalorder %s156, %s157
    %p166 = scmp.eq.s32.totalorder %s20, 0
    %p167 = por %p165, %p166
    %p168 = scmp.ne.s32.totalorder %s156, %s157
    %p169 = scmp.eq.s32.totalorder %s21, 1
    %p170 = por %p168, %p169
    %p172 = scmp.ne.s32.totalorder %s157, %s171
    %p173 = scmp.eq.s32.totalorder %s21, 0
    %p174 = por %p172, %p173
    %s175 = ssub.s32 %s15, %s22
    %p176 = scmp.eq.s32.totalorder %s175, 0
    %s178 = sadd.s32 %s177, 1
    %s179 = scalar_select %p176, %s177, %s178
    %p182 = pneg %p176
    %p183 = scmp.eq.s32.totalorder %s15, 1
    %p184 = por %p182, %p183
    %p185 = scmp.ne.s32.totalorder %s177, %s180
    %p186 = scmp.eq.s32.totalorder %s15, 0
    %p187 = por %p185, %p186
    %p188 = scmp.ne.s32.totalorder %s177, %s180
    %p189 = scmp.eq.s32.totalorder %s20, 1
    %p190 = por %p188, %p189
    %p191 = scmp.ne.s32.totalorder %s180, %s181
    %p192 = scmp.eq.s32.totalorder %s20, 0
    %p193 = por %p191, %p192
    %p194 = scmp.ne.s32.totalorder %s180, %s181
    %p195 = scmp.eq.s32.totalorder %s21, 1
    %p196 = por %p194, %p195
    %p198 = scmp.ne.s32.totalorder %s181, %s197
    %p199 = scmp.eq.s32.totalorder %s21, 0
    %p200 = por %p198, %p199
    %s201 = ssub.s32 %s15, %s22
    %p202 = scmp.eq.s32.totalorder %s201, 0
    %s204 = sadd.s32 %s203, 1
    %s205 = scalar_select %p202, %s203, %s204
    %p208 = pneg %p202
    %p209 = scmp.eq.s32.totalorder %s15, 1
    %p210 = por %p208, %p209
    %p211 = scmp.ne.s32.totalorder %s203, %s206
    %p212 = scmp.eq.s32.totalorder %s15, 0
    %p213 = por %p211, %p212
    %p214 = scmp.ne.s32.totalorder %s203, %s206
    %p215 = scmp.eq.s32.totalorder %s20, 1
    %p216 = por %p214, %p215
    %p217 = scmp.ne.s32.totalorder %s206, %s207
    %p218 = scmp.eq.s32.totalorder %s20, 0
    %p219 = por %p217, %p218
    %p220 = scmp.ne.s32.totalorder %s206, %s207
    %p221 = scmp.eq.s32.totalorder %s21, 1
    %p222 = por %p220, %p221
    %p224 = scmp.ne.s32.totalorder %s207, %s223
    %p225 = scmp.eq.s32.totalorder %s21, 0
    %p226 = por %p224, %p225
    %p227 = scmp.le.s32.totalorder 1, %s15
    %p228 = scmp.lt.s32.totalorder %s15, 3
    %p229 = pnand %p227, %p228
    %p230 = pneg %p229
    // Predicated region
    $region9: #{tpu_custom_call.1} parent=5 // pred_check
      _
    $region10: #{tpu_custom_call.1} parent=5 // pred_check_branch
      %232 = sbr.rel (%p229) target = $region12
    $region11: #{tpu_custom_call.1} parent=5 // pred_region
      %s233 = ssub.s32 %s15, 1
      // Predicated region
      $region13: #{tpu_custom_call.1} parent=11 // pred_check
        %p234 = pneg %p62
      $region14: #{tpu_custom_call.1} parent=11 // pred_check_branch
        %236 = sbr.rel (%p234) target = $region16
      $region15: #{tpu_custom_call.1} parent=11 // pred_region
        _
      $region16: #{tpu_custom_call.1} parent=11 // pred_fallthru
        _
      // Predicated region
      $region17: #{tpu_custom_call.1} parent=11 // pred_check
        %p237 = pneg %p83
      $region18: #{tpu_custom_call.1} parent=11 // pred_check_branch
        %239 = sbr.rel (%p237) target = $region20
      $region19: #{tpu_custom_call.1} parent=11 // pred_region
        _
      $region20: #{tpu_custom_call.1} parent=11 // pred_fallthru
        _
      // Predicated region
      $region21: #{tpu_custom_call.1} parent=11 // pred_check
        %p240 = pneg %p104
      $region22: #{tpu_custom_call.1} parent=11 // pred_check_branch
        %242 = sbr.rel (%p240) target = $region24
      $region23: #{tpu_custom_call.1} parent=11 // pred_region
        _
      $region24: #{tpu_custom_call.1} parent=11 // pred_fallthru
        _
      // Predicated region
      $region25: #{tpu_custom_call.1} parent=11 // pred_check
        %p243 = pneg %p125
      $region26: #{tpu_custom_call.1} parent=11 // pred_check_branch
        %245 = sbr.rel (%p243) target = $region28
      $region27: #{tpu_custom_call.1} parent=11 // pred_region
        _
      $region28: #{tpu_custom_call.1} parent=11 // pred_fallthru
        _
      // Predicated region
      $region29: #{tpu_custom_call.1} parent=11 // pred_check
        %p246 = pneg %p146
      $region30: #{tpu_custom_call.1} parent=11 // pred_check_branch
        %248 = sbr.rel (%p246) target = $region32
      $region31: #{tpu_custom_call.1} parent=11 // pred_region
        _
      $region32: #{tpu_custom_call.1} parent=11 // pred_fallthru
        _
      // Predicated region
      $region33: #{tpu_custom_call.1} parent=11 // pred_check
        %p249 = pneg %p167
      $region34: #{tpu_custom_call.1} parent=11 // pred_check_branch
        %251 = sbr.rel (%p249) target = $region36
      $region35: #{tpu_custom_call.1} parent=11 // pred_region
        _
      $region36: #{tpu_custom_call.1} parent=11 // pred_fallthru
        _
    $region12: #{tpu_custom_call.1} parent=5 // pred_fallthru
      _
    %p252 = scmp.lt.s32.totalorder %s15, 2
    // Predicated region
    $region37: #{tpu_custom_call.1} parent=5 // pred_check
      %p253 = pneg %p252
    $region38: #{tpu_custom_call.1} parent=5 // pred_check_branch
      %255 = sbr.rel (%p253) target = $region40
    $region39: #{tpu_custom_call.1} parent=5 // pred_region
      // Predicated region
      $region41: #{tpu_custom_call.1} parent=39 // pred_check
        %p256 = pneg %p35
      $region42: #{tpu_custom_call.1} parent=39 // pred_check_branch
        %258 = sbr.rel (%p256) target = $region44
      $region43: #{tpu_custom_call.1} parent=39 // pred_region
        %s259 = smul.u32 16, %s15
        %p260 = scmp.lt.s32.totalorder %s259, 31
        %s261 = scalar_select %p260, %s259, 31
        %s262 = smul.addr %s261, 8
        %s263 = scalar_lea.vmem %s0, %s262
        %s264 = smul.u32 16, %s15
      $region44: #{tpu_custom_call.1} parent=39 // pred_fallthru
        _
    $region40: #{tpu_custom_call.1} parent=5 // pred_fallthru
      _
    %p265 = scmp.le.s32.totalorder 1, %s15
    %p266 = scmp.lt.s32.totalorder %s15, 3
    %p267 = pnand %p265, %p266
    %p268 = pneg %p267
    // Predicated region
    $region45: #{tpu_custom_call.1} parent=5 // pred_check
      _
    $region46: #{tpu_custom_call.1} parent=5 // pred_check_branch
      %270 = sbr.rel (%p267) target = $region48
    $region47: #{tpu_custom_call.1} parent=5 // pred_region
      %s271 = ssub.s32 %s15, 1
      %s272 = smul.u32 16, %s20
      %p273 = scmp.lt.s32.totalorder %s272, 31
      %s274 = scalar_select %p273, %s272, 31
      %s275 = smul.addr %s274, 8
      %s276 = scalar_lea.vmem %s0, %s275
      %p277 = pneg %p41
      %p278 = pneg %p38
      %p279 = pneg %p62
      %p280 = pneg %p59
      %p281 = pneg %p83
      %p282 = pneg %p80
      %p283 = pneg %p104
      %p284 = pneg %p101
      %p285 = pneg %p125
      %p286 = pneg %p122
      %p287 = pneg %p146
      %p288 = pneg %p143
      %p289 = pneg %p167
      %p290 = pneg %p164
      %p291 = pneg %p193
      %p292 = pneg %p190
      %s293 = smul.u32 16, %s20
      %p294 = scmp.lt.s32.totalorder %s293, 31
      %s295 = scalar_select %p294, %s293, 31
      %s296 = smul.addr %s295, 8
      %s297 = scalar_lea.vmem %s7, %s296
      %p298 = pneg %p219
      %p299 = pneg %p216
      %s300 = smul.u32 16, %s20
      %p301 = scmp.lt.s32.totalorder %s300, 31
      %s302 = scalar_select %p301, %s300, 31
      %s303 = smul.addr %s302, 8
      %s304 = scalar_lea.vmem %s8, %s303
      %s305 = smul.u32 16, %s20
      %p306 = scmp.lt.s32.totalorder %s305, 31
      %s307 = scalar_select %p306, %s305, 31
      %s308 = smul.addr %s307, 8
      %s309 = scalar_lea.vmem %s0, %s308
      %s310 = smul.u32 16, %s20
      %s311 = smul.u32 16, %s20
      %p312 = scmp.lt.s32.totalorder %s311, 31
      %s313 = scalar_select %p312, %s311, 31
      %s314 = smul.addr %s313, 8
      %s315 = scalar_lea.vmem %s7, %s314
      %s316 = smul.u32 16, %s20
      %s317 = smul.u32 16, %s20
      %p318 = scmp.lt.s32.totalorder %s317, 31
      %s319 = scalar_select %p318, %s317, 31
      %s320 = smul.addr %s319, 8
      %s321 = scalar_lea.vmem %s8, %s320
      %s322 = smul.u32 16, %s20
      %v324 = vld [vmem:[%s309] sm:$0xff]
      %v325 = vld [vmem:[%s309 + $0x8] sm:$0xff]
      %v326 = vld [vmem:[%s309 + $0x10] sm:$0xff]
      %v327 = vld [vmem:[%s309 + $0x18] sm:$0xff]
      %v328 = vld [vmem:[%s309 + $0x20] sm:$0xff]
      %v329 = vld [vmem:[%s309 + $0x28] sm:$0xff]
      %v330 = vld [vmem:[%s309 + $0x30] sm:$0xff]
      %v331 = vld [vmem:[%s309 + $0x38] sm:$0xff]
      %v332 = vld [vmem:[%s309 + $0x40] sm:$0xff]
      %v333 = vld [vmem:[%s309 + $0x48] sm:$0xff]
      %v334 = vld [vmem:[%s309 + $0x50] sm:$0xff]
      %v335 = vld [vmem:[%s309 + $0x58] sm:$0xff]
      %v336 = vld [vmem:[%s309 + $0x60] sm:$0xff]
      %v337 = vld [vmem:[%s309 + $0x68] sm:$0xff]
      %v338 = vld [vmem:[%s309 + $0x70] sm:$0xff]
      %v339 = vld [vmem:[%s309 + $0x78] sm:$0xff]
      %v340 = vpack.c.bf16 %v325, %v324
      %v341 = vpack.c.bf16 %v327, %v326
      %v342 = vpack.c.bf16 %v329, %v328
      %v343 = vpack.c.bf16 %v331, %v330
      %v344 = vpack.c.bf16 %v333, %v332
      %v345 = vpack.c.bf16 %v335, %v334
      %v346 = vpack.c.bf16 %v337, %v336
      %v347 = vpack.c.bf16 %v339, %v338
      %v348 = vld [vmem:[%s1] sm:$0xf]
      %v349 = vld [vmem:[%s1 + $0x4] sm:$0xf]
      %v350 = vld [vmem:[%s1 + $0x8] sm:$0xf]
      %v351 = vld [vmem:[%s1 + $0xc] sm:$0xf]
      %v352 = vld [vmem:[%s2] sm:$0x1]
      %v354 = vlaneseq
      %v355 = vshrl.u32 %v354, 7
      %v356 = vsub.s32 0, %v355
      %v357 = vrot.slane %v352, %v356
      %v363 = vunpack.c.l.b16 %v348
      %v364 = vunpack.c.l.b16 %v349
      %v365 = vunpack.c.l.b16 %v350
      %v366 = vunpack.c.l.b16 %v351
      %v367 = vpack.c.b16 %v364, %v363
      %v368 = vpack.c.b16 %v366, %v365
      %vm371 = vcmask 261120
      %v373 = vsel %vm371, %v340, 0
      %v376 = vsel %vm371, %v341, 0
      %v379 = vsel %vm371, %v342, 0
      %v382 = vsel %vm371, %v343, 0
      %v385 = vsel %vm371, %v344, 0
      %v388 = vsel %vm371, %v345, 0
      %v391 = vsel %vm371, %v346, 0
      %v394 = vsel %vm371, %v347, 0
      %396 = vmatprep.subr.bf16.mxu0 0
      %397 = vmatpush1.bf16.msra.mxu0 %v367
      %398 = vmatprep.subr.bf16.mxu0 0
      %399 = vmatpush1.bf16.msra.mxu0 %v368
      %400 = vmatprep.subr.bf16.mxu0 0
      %401 = vmatpush1.bf16.msra.mxu0 0
      %402 = vmatprep.subr.bf16.mxu0 0
      %403 = vmatpush1.bf16.msra.mxu0 0
      %404 = vmatprep.subr.bf16.mxu0 0
      %405 = vmatpush1.bf16.msra.mxu0 0
      %406 = vmatprep.subr.bf16.mxu0 0
      %407 = vmatpush1.bf16.msra.mxu0 0
      %408 = vmatprep.subr.bf16.mxu0 0
      %409 = vmatpush1.bf16.msra.mxu0 0
      %410 = vmatprep.subr.bf16.mxu0 0
      %411 = vmatpush1.bf16.msra.mxu0 0
      %412 = vmatprep.subr.bf16.mxu0 0
      %413 = vmatpush1.bf16.msra.mxu0 0
      %414 = vmatprep.subr.bf16.mxu0 0
      %415 = vmatpush1.bf16.msra.mxu0 0
      %416 = vmatprep.subr.bf16.mxu0 0
      %417 = vmatpush1.bf16.msra.mxu0 0
      %418 = vmatprep.subr.bf16.mxu0 0
      %419 = vmatpush1.bf16.msra.mxu0 0
      %420 = vmatprep.subr.bf16.mxu0 0
      %421 = vmatpush1.bf16.msra.mxu0 0
      %422 = vmatprep.subr.bf16.mxu0 0
      %423 = vmatpush1.bf16.msra.mxu0 0
      %424 = vmatprep.subr.bf16.mxu0 0
      %425 = vmatpush1.bf16.msra.mxu0 0
      %426 = vmatprep.subr.bf16.mxu0 0
      %427 = vmatpush1.bf16.msra.mxu0 0
      %428 = vmatprep.mubr.bf16.mxu0 0
      %429 = vmatmul.mubr.bf16.gmra.mrb[0].mxu0 %v373
      %v430 = vpop.f32.mrb[0].mxu0
      %v431 = vadd.f32 %v357, %v430
      %v432 = vpop.f32.mrb[0].mxu0
      %v433 = vpop.f32.mrb[0].mxu0
      %v434 = vadd.f32 %v357, %v433
      %v435 = vpop.f32.mrb[0].mxu0
      %436 = vmatprep.mubr.bf16.mxu0 0
      %437 = vmatmul.mubr.bf16.gmra.mrb[0].mxu0 %v376
      %v438 = vpop.f32.mrb[0].mxu0
      %v439 = vadd.f32 %v357, %v438
      %v440 = vpop.f32.mrb[0].mxu0
      %v441 = vpop.f32.mrb[0].mxu0
      %v442 = vadd.f32 %v357, %v441
      %v443 = vpop.f32.mrb[0].mxu0
      %444 = vmatprep.mubr.bf16.mxu0 0
      %445 = vmatmul.mubr.bf16.gmra.mrb[0].mxu0 %v379
      %v446 = vpop.f32.mrb[0].mxu0
      %v447 = vadd.f32 %v357, %v446
      %v448 = vpop.f32.mrb[0].mxu0
      %v449 = vpop.f32.mrb[0].mxu0
      %v450 = vadd.f32 %v357, %v449
      %v451 = vpop.f32.mrb[0].mxu0
      %452 = vmatprep.mubr.bf16.mxu0 0
      %453 = vmatmul.mubr.bf16.gmra.mrb[0].mxu0 %v382
      %v454 = vpop.f32.mrb[0].mxu0
      %v455 = vadd.f32 %v357, %v454
      %v456 = vpop.f32.mrb[0].mxu0
      %v457 = vpop.f32.mrb[0].mxu0
      %v458 = vadd.f32 %v357, %v457
      %v459 = vpop.f32.mrb[0].mxu0
      %460 = vmatprep.mubr.bf16.mxu0 0
      %461 = vmatmul.mubr.bf16.gmra.mrb[0].mxu0 %v385
      %v462 = vpop.f32.mrb[0].mxu0
      %v463 = vadd.f32 %v357, %v462
      %v464 = vpop.f32.mrb[0].mxu0
      %v465 = vpop.f32.mrb[0].mxu0
      %v466 = vadd.f32 %v357, %v465
      %v467 = vpop.f32.mrb[0].mxu0
      %468 = vmatprep.mubr.bf16.mxu0 0
      %469 = vmatmul.mubr.bf16.gmra.mrb[0].mxu0 %v388
      %v470 = vpop.f32.mrb[0].mxu0
      %v471 = vadd.f32 %v357, %v470
      %v472 = vpop.f32.mrb[0].mxu0
      %v473 = vpop.f32.mrb[0].mxu0
      %v474 = vadd.f32 %v357, %v473
      %v475 = vpop.f32.mrb[0].mxu0
      %476 = vmatprep.mubr.bf16.mxu0 0
      %477 = vmatmul.mubr.bf16.gmra.mrb[0].mxu0 %v391
      %v478 = vpop.f32.mrb[0].mxu0
      %v479 = vadd.f32 %v357, %v478
      %v480 = vpop.f32.mrb[0].mxu0
      %v481 = vpop.f32.mrb[0].mxu0
      %v482 = vadd.f32 %v357, %v481
      %v483 = vpop.f32.mrb[0].mxu0
      %484 = vmatprep.mubr.bf16.mxu0 0
      %485 = vmatmul.mubr.bf16.gmra.mrb[0].mxu0 %v394
      %v486 = vpop.f32.mrb[0].mxu0
      %v487 = vadd.f32 %v357, %v486
      %v488 = vpop.f32.mrb[0].mxu0
      %v489 = vpop.f32.mrb[0].mxu0
      %v490 = vadd.f32 %v357, %v489
      %v491 = vpop.f32.mrb[0].mxu0
      %492 = vdwg.mxu0
      %509 = vrot.lane.b32.xlu0 %v431, 96
      %v510 = vpop.permute.xlu0 %509
      %511 = vrot.lane.b32.xlu0 %v434, 96
      %v512 = vpop.permute.xlu0 %511
      %513 = vrot.lane.b32.xlu0 %v439, 96
      %v514 = vpop.permute.xlu0 %513
      %515 = vrot.lane.b32.xlu0 %v442, 96
      %v516 = vpop.permute.xlu0 %515
      %517 = vrot.lane.b32.xlu0 %v447, 96
      %v518 = vpop.permute.xlu0 %517
      %519 = vrot.lane.b32.xlu0 %v450, 96
      %v520 = vpop.permute.xlu0 %519
      %521 = vrot.lane.b32.xlu0 %v455, 96
      %v522 = vpop.permute.xlu0 %521
      %523 = vrot.lane.b32.xlu0 %v458, 96
      %v524 = vpop.permute.xlu0 %523
      %525 = vrot.lane.b32.xlu0 %v463, 96
      %v526 = vpop.permute.xlu0 %525
      %527 = vrot.lane.b32.xlu0 %v466, 96
      %v528 = vpop.permute.xlu0 %527
      %529 = vrot.lane.b32.xlu0 %v471, 96
      %v530 = vpop.permute.xlu0 %529
      %531 = vrot.lane.b32.xlu0 %v474, 96
      %v532 = vpop.permute.xlu0 %531
      %533 = vrot.lane.b32.xlu0 %v479, 96
      %v534 = vpop.permute.xlu0 %533
      %535 = vrot.lane.b32.xlu0 %v482, 96
      %v536 = vpop.permute.xlu0 %535
      %537 = vrot.lane.b32.xlu0 %v487, 96
      %v538 = vpop.permute.xlu0 %537
      %539 = vrot.lane.b32.xlu0 %v490, 96
      %v540 = vpop.permute.xlu0 %539
      %vm557 = vcmask 15360
      %558 = vst.msk [vmem:[%s315] sm:$0xff] %vm557, %v510
      %559 = vst.msk [vmem:[%s315 + $0x8] sm:$0xff] %vm557, %v512
      %560 = vst.msk [vmem:[%s315 + $0x10] sm:$0xff] %vm557, %v514
      %561 = vst.msk [vmem:[%s315 + $0x18] sm:$0xff] %vm557, %v516
      %562 = vst.msk [vmem:[%s315 + $0x20] sm:$0xff] %vm557, %v518
      %563 = vst.msk [vmem:[%s315 + $0x28] sm:$0xff] %vm557, %v520
      %564 = vst.msk [vmem:[%s315 + $0x30] sm:$0xff] %vm557, %v522
      %565 = vst.msk [vmem:[%s315 + $0x38] sm:$0xff] %vm557, %v524
      %566 = vst.msk [vmem:[%s315 + $0x40] sm:$0xff] %vm557, %v526
      %567 = vst.msk [vmem:[%s315 + $0x48] sm:$0xff] %vm557, %v528
      %568 = vst.msk [vmem:[%s315 + $0x50] sm:$0xff] %vm557, %v530
      %569 = vst.msk [vmem:[%s315 + $0x58] sm:$0xff] %vm557, %v532
      %570 = vst.msk [vmem:[%s315 + $0x60] sm:$0xff] %vm557, %v534
      %571 = vst.msk [vmem:[%s315 + $0x68] sm:$0xff] %vm557, %v536
      %572 = vst.msk [vmem:[%s315 + $0x70] sm:$0xff] %vm557, %v538
      %573 = vst.msk [vmem:[%s315 + $0x78] sm:$0xff] %vm557, %v540
      %v574 = vmax.f32 %v431, 0.0
      %v575 = vmax.f32 %v434, 0.0
      %v576 = vmax.f32 %v439, 0.0
      %v577 = vmax.f32 %v442, 0.0
      %v578 = vmax.f32 %v447, 0.0
      %v579 = vmax.f32 %v450, 0.0
      %v580 = vmax.f32 %v455, 0.0
      %v581 = vmax.f32 %v458, 0.0
      %v582 = vmax.f32 %v463, 0.0
      %v583 = vmax.f32 %v466, 0.0
      %v584 = vmax.f32 %v471, 0.0
      %v585 = vmax.f32 %v474, 0.0
      %v586 = vmax.f32 %v479, 0.0
      %v587 = vmax.f32 %v482, 0.0
      %v588 = vmax.f32 %v487, 0.0
      %v589 = vmax.f32 %v490, 0.0
      %v590 = vpack.c.bf16 %v575, %v574
      %v591 = vpack.c.bf16 %v577, %v576
      %v592 = vpack.c.bf16 %v579, %v578
      %v593 = vpack.c.bf16 %v581, %v580
      %v594 = vpack.c.bf16 %v583, %v582
      %v595 = vpack.c.bf16 %v585, %v584
      %v596 = vpack.c.bf16 %v587, %v586
      %v597 = vpack.c.bf16 %v589, %v588
      %v598 = vld [vmem:[%s3] sm:$0xf]
      %v599 = vld [vmem:[%s3 + $0x4] sm:$0xf]
      %v600 = vld [vmem:[%s3 + $0x8] sm:$0xf]
      %v601 = vld [vmem:[%s3 + $0xc] sm:$0xf]
      %v602 = vld [vmem:[%s4] sm:$0x1]
      %v604 = vlaneseq
      %v605 = vshrl.u32 %v604, 7
      %v606 = vsub.s32 0, %v605
      %v607 = vrot.slane %v602, %v606
      %v613 = vunpack.c.l.b16 %v598
      %v614 = vunpack.c.l.b16 %v599
      %v615 = vunpack.c.l.b16 %v600
      %v616 = vunpack.c.l.b16 %v601
      %v617 = vpack.c.b16 %v614, %v613
      %v618 = vpack.c.b16 %v616, %v615
      %v622 = vsel %vm371, %v590, 0
      %v625 = vsel %vm371, %v591, 0
      %v628 = vsel %vm371, %v592, 0
      %v631 = vsel %vm371, %v593, 0
      %v634 = vsel %vm371, %v594, 0
      %v637 = vsel %vm371, %v595, 0
      %v640 = vsel %vm371, %v596, 0
      %v643 = vsel %vm371, %v597, 0
      %645 = vmatprep.subr.bf16.mxu0 0
      %646 = vmatpush1.bf16.msra.mxu0 %v617
      %647 = vmatprep.subr.bf16.mxu0 0
      %648 = vmatpush1.bf16.msra.mxu0 %v618
      %649 = vmatprep.subr.bf16.mxu0 0
      %650 = vmatpush1.bf16.msra.mxu0 0
      %651 = vmatprep.subr.bf16.mxu0 0
      %652 = vmatpush1.bf16.msra.mxu0 0
      %653 = vmatprep.subr.bf16.mxu0 0
      %654 = vmatpush1.bf16.msra.mxu0 0
      %655 = vmatprep.subr.bf16.mxu0 0
      %656 = vmatpush1.bf16.msra.mxu0 0
      %657 = vmatprep.subr.bf16.mxu0 0
      %658 = vmatpush1.bf16.msra.mxu0 0
      %659 = vmatprep.subr.bf16.mxu0 0
      %660 = vmatpush1.bf16.msra.mxu0 0
      %661 = vmatprep.subr.bf16.mxu0 0
      %662 = vmatpush1.bf16.msra.mxu0 0
      %663 = vmatprep.subr.bf16.mxu0 0
      %664 = vmatpush1.bf16.msra.mxu0 0
      %665 = vmatprep.subr.bf16.mxu0 0
      %666 = vmatpush1.bf16.msra.mxu0 0
      %667 = vmatprep.subr.bf16.mxu0 0
      %668 = vmatpush1.bf16.msra.mxu0 0
      %669 = vmatprep.subr.bf16.mxu0 0
      %670 = vmatpush1.bf16.msra.mxu0 0
      %671 = vmatprep.subr.bf16.mxu0 0
      %672 = vmatpush1.bf16.msra.mxu0 0
      %673 = vmatprep.subr.bf16.mxu0 0
      %674 = vmatpush1.bf16.msra.mxu0 0
      %675 = vmatprep.subr.bf16.mxu0 0
      %676 = vmatpush1.bf16.msra.mxu0 0
      %677 = vmatprep.mubr.bf16.mxu0 0
      %678 = vmatmul.mubr.bf16.gmra.mrb[0].mxu0 %v622
      %v679 = vpop.f32.mrb[0].mxu0
      %v680 = vadd.f32 %v607, %v679
      %v681 = vpop.f32.mrb[0].mxu0
      %v682 = vpop.f32.mrb[0].mxu0
      %v683 = vadd.f32 %v607, %v682
      %v684 = vpop.f32.mrb[0].mxu0
      %685 = vmatprep.mubr.bf16.mxu0 0
      %686 = vmatmul.mubr.bf16.gmra.mrb[0].mxu0 %v625
      %v687 = vpop.f32.mrb[0].mxu0
      %v688 = vadd.f32 %v607, %v687
      %v689 = vpop.f32.mrb[0].mxu0
      %v690 = vpop.f32.mrb[0].mxu0
      %v691 = vadd.f32 %v607, %v690
      %v692 = vpop.f32.mrb[0].mxu0
      %693 = vmatprep.mubr.bf16.mxu0 0
      %694 = vmatmul.mubr.bf16.gmra.mrb[0].mxu0 %v628
      %v695 = vpop.f32.mrb[0].mxu0
      %v696 = vadd.f32 %v607, %v695
      %v697 = vpop.f32.mrb[0].mxu0
      %v698 = vpop.f32.mrb[0].mxu0
      %v699 = vadd.f32 %v607, %v698
      %v700 = vpop.f32.mrb[0].mxu0
      %701 = vmatprep.mubr.bf16.mxu0 0
      %702 = vmatmul.mubr.bf16.gmra.mrb[0].mxu0 %v631
      %v703 = vpop.f32.mrb[0].mxu0
      %v704 = vadd.f32 %v607, %v703
      %v705 = vpop.f32.mrb[0].mxu0
      %v706 = vpop.f32.mrb[0].mxu0
      %v707 = vadd.f32 %v607, %v706
      %v708 = vpop.f32.mrb[0].mxu0
      %709 = vmatprep.mubr.bf16.mxu0 0
      %710 = vmatmul.mubr.bf16.gmra.mrb[0].mxu0 %v634
      %v711 = vpop.f32.mrb[0].mxu0
      %v712 = vadd.f32 %v607, %v711
      %v713 = vpop.f32.mrb[0].mxu0
      %v714 = vpop.f32.mrb[0].mxu0
      %v715 = vadd.f32 %v607, %v714
      %v716 = vpop.f32.mrb[0].mxu0
      %717 = vmatprep.mubr.bf16.mxu0 0
      %718 = vmatmul.mubr.bf16.gmra.mrb[0].mxu0 %v637
      %v719 = vpop.f32.mrb[0].mxu0
      %v720 = vadd.f32 %v607, %v719
      %v721 = vpop.f32.mrb[0].mxu0
      %v722 = vpop.f32.mrb[0].mxu0
      %v723 = vadd.f32 %v607, %v722
      %v724 = vpop.f32.mrb[0].mxu0
      %725 = vmatprep.mubr.bf16.mxu0 0
      %726 = vmatmul.mubr.bf16.gmra.mrb[0].mxu0 %v640
      %v727 = vpop.f32.mrb[0].mxu0
      %v728 = vadd.f32 %v607, %v727
      %v729 = vpop.f32.mrb[0].mxu0
      %v730 = vpop.f32.mrb[0].mxu0
      %v731 = vadd.f32 %v607, %v730
      %v732 = vpop.f32.mrb[0].mxu0
      %733 = vmatprep.mubr.bf16.mxu0 0
      %734 = vmatmul.mubr.bf16.gmra.mrb[0].mxu0 %v643
      %v735 = vpop.f32.mrb[0].mxu0
      %v736 = vadd.f32 %v607, %v735
      %v737 = vpop.f32.mrb[0].mxu0
      %v738 = vpop.f32.mrb[0].mxu0
      %v739 = vadd.f32 %v607, %v738
      %v740 = vpop.f32.mrb[0].mxu0
      %741 = vdwg.mxu0
      %v742 = vmax.f32 %v680, 0.0
      %v743 = vmax.f32 %v683, 0.0
      %v744 = vmax.f32 %v688, 0.0
      %v745 = vmax.f32 %v691, 0.0
      %v746 = vmax.f32 %v696, 0.0
      %v747 = vmax.f32 %v699, 0.0
      %v748 = vmax.f32 %v704, 0.0
      %v749 = vmax.f32 %v707, 0.0
      %v750 = vmax.f32 %v712, 0.0
      %v751 = vmax.f32 %v715, 0.0
      %v752 = vmax.f32 %v720, 0.0
      %v753 = vmax.f32 %v723, 0.0
      %v754 = vmax.f32 %v728, 0.0
      %v755 = vmax.f32 %v731, 0.0
      %v756 = vmax.f32 %v736, 0.0
      %v757 = vmax.f32 %v739, 0.0
      %v758 = vpack.c.bf16 %v743, %v742
      %v759 = vpack.c.bf16 %v745, %v744
      %v760 = vpack.c.bf16 %v747, %v746
      %v761 = vpack.c.bf16 %v749, %v748
      %v762 = vpack.c.bf16 %v751, %v750
      %v763 = vpack.c.bf16 %v753, %v752
      %v764 = vpack.c.bf16 %v755, %v754
      %v765 = vpack.c.bf16 %v757, %v756
      %v766 = vld [vmem:[%s5] sm:$0xf]
      %v767 = vld [vmem:[%s5 + $0x4] sm:$0xf]
      %v768 = vld [vmem:[%s5 + $0x8] sm:$0xf]
      %v769 = vld [vmem:[%s5 + $0xc] sm:$0xf]
      %v770 = vld [vmem:[%s6] sm:$0x1]
      %v772 = vlaneseq
      %v773 = vshrl.u32 %v772, 7
      %v774 = vsub.s32 0, %v773
      %v775 = vrot.slane %v770, %v774
      %v781 = vunpack.c.l.b16 %v766
      %v782 = vunpack.c.l.b16 %v767
      %v783 = vunpack.c.l.b16 %v768
      %v784 = vunpack.c.l.b16 %v769
      %v785 = vpack.c.b16 %v782, %v781
      %v786 = vpack.c.b16 %v784, %v783
      %v790 = vsel %vm371, %v758, 0
      %v793 = vsel %vm371, %v759, 0
      %v796 = vsel %vm371, %v760, 0
      %v799 = vsel %vm371, %v761, 0
      %v802 = vsel %vm371, %v762, 0
      %v805 = vsel %vm371, %v763, 0
      %v808 = vsel %vm371, %v764, 0
      %v811 = vsel %vm371, %v765, 0
      %813 = vmatprep.subr.bf16.mxu0 0
      %814 = vmatpush1.bf16.msra.mxu0 %v785
      %815 = vmatprep.subr.bf16.mxu0 0
      %816 = vmatpush1.bf16.msra.mxu0 %v786
      %817 = vmatprep.subr.bf16.mxu0 0
      %818 = vmatpush1.bf16.msra.mxu0 0
      %819 = vmatprep.subr.bf16.mxu0 0
      %820 = vmatpush1.bf16.msra.mxu0 0
      %821 = vmatprep.subr.bf16.mxu0 0
      %822 = vmatpush1.bf16.msra.mxu0 0
      %823 = vmatprep.subr.bf16.mxu0 0
      %824 = vmatpush1.bf16.msra.mxu0 0
      %825 = vmatprep.subr.bf16.mxu0 0
      %826 = vmatpush1.bf16.msra.mxu0 0
      %827 = vmatprep.subr.bf16.mxu0 0
      %828 = vmatpush1.bf16.msra.mxu0 0
      %829 = vmatprep.subr.bf16.mxu0 0
      %830 = vmatpush1.bf16.msra.mxu0 0
      %831 = vmatprep.subr.bf16.mxu0 0
      %832 = vmatpush1.bf16.msra.mxu0 0
      %833 = vmatprep.subr.bf16.mxu0 0
      %834 = vmatpush1.bf16.msra.mxu0 0
      %835 = vmatprep.subr.bf16.mxu0 0
      %836 = vmatpush1.bf16.msra.mxu0 0
      %837 = vmatprep.subr.bf16.mxu0 0
      %838 = vmatpush1.bf16.msra.mxu0 0
      %839 = vmatprep.subr.bf16.mxu0 0
      %840 = vmatpush1.bf16.msra.mxu0 0
      %841 = vmatprep.subr.bf16.mxu0 0
      %842 = vmatpush1.bf16.msra.mxu0 0
      %843 = vmatprep.subr.bf16.mxu0 0
      %844 = vmatpush1.bf16.msra.mxu0 0
      %845 = vmatprep.mubr.bf16.mxu0 0
      %846 = vmatmul.mubr.bf16.gmra.mrb[0].mxu0 %v790
      %v847 = vpop.f32.mrb[0].mxu0
      %v848 = vadd.f32 %v775, %v847
      %v849 = vpop.f32.mrb[0].mxu0
      %v850 = vpop.f32.mrb[0].mxu0
      %v851 = vadd.f32 %v775, %v850
      %v852 = vpop.f32.mrb[0].mxu0
      %853 = vmatprep.mubr.bf16.mxu0 0
      %854 = vmatmul.mubr.bf16.gmra.mrb[0].mxu0 %v793
      %v855 = vpop.f32.mrb[0].mxu0
      %v856 = vadd.f32 %v775, %v855
      %v857 = vpop.f32.mrb[0].mxu0
      %v858 = vpop.f32.mrb[0].mxu0
      %v859 = vadd.f32 %v775, %v858
      %v860 = vpop.f32.mrb[0].mxu0
      %861 = vmatprep.mubr.bf16.mxu0 0
      %862 = vmatmul.mubr.bf16.gmra.mrb[0].mxu0 %v796
      %v863 = vpop.f32.mrb[0].mxu0
      %v864 = vadd.f32 %v775, %v863
      %v865 = vpop.f32.mrb[0].mxu0
      %v866 = vpop.f32.mrb[0].mxu0
      %v867 = vadd.f32 %v775, %v866
      %v868 = vpop.f32.mrb[0].mxu0
      %869 = vmatprep.mubr.bf16.mxu0 0
      %870 = vmatmul.mubr.bf16.gmra.mrb[0].mxu0 %v799
      %v871 = vpop.f32.mrb[0].mxu0
      %v872 = vadd.f32 %v775, %v871
      %v873 = vpop.f32.mrb[0].mxu0
      %v874 = vpop.f32.mrb[0].mxu0
      %v875 = vadd.f32 %v775, %v874
      %v876 = vpop.f32.mrb[0].mxu0
      %877 = vmatprep.mubr.bf16.mxu0 0
      %878 = vmatmul.mubr.bf16.gmra.mrb[0].mxu0 %v802
      %v879 = vpop.f32.mrb[0].mxu0
      %v880 = vadd.f32 %v775, %v879
      %v881 = vpop.f32.mrb[0].mxu0
      %v882 = vpop.f32.mrb[0].mxu0
      %v883 = vadd.f32 %v775, %v882
      %v884 = vpop.f32.mrb[0].mxu0
      %885 = vmatprep.mubr.bf16.mxu0 0
      %886 = vmatmul.mubr.bf16.gmra.mrb[0].mxu0 %v805
      %v887 = vpop.f32.mrb[0].mxu0
      %v888 = vadd.f32 %v775, %v887
      %v889 = vpop.f32.mrb[0].mxu0
      %v890 = vpop.f32.mrb[0].mxu0
      %v891 = vadd.f32 %v775, %v890
      %v892 = vpop.f32.mrb[0].mxu0
      %893 = vmatprep.mubr.bf16.mxu0 0
      %894 = vmatmul.mubr.bf16.gmra.mrb[0].mxu0 %v808
      %v895 = vpop.f32.mrb[0].mxu0
      %v896 = vadd.f32 %v775, %v895
      %v897 = vpop.f32.mrb[0].mxu0
      %v898 = vpop.f32.mrb[0].mxu0
      %v899 = vadd.f32 %v775, %v898
      %v900 = vpop.f32.mrb[0].mxu0
      %901 = vmatprep.mubr.bf16.mxu0 0
      %902 = vmatmul.mubr.bf16.gmra.mrb[0].mxu0 %v811
      %v903 = vpop.f32.mrb[0].mxu0
      %v904 = vadd.f32 %v775, %v903
      %v905 = vpop.f32.mrb[0].mxu0
      %v906 = vpop.f32.mrb[0].mxu0
      %v907 = vadd.f32 %v775, %v906
      %v908 = vpop.f32.mrb[0].mxu0
      %909 = vdwg.mxu0
      %v910 = vtanh.pop %v848
      %v911 = vtanh.pop %v851
      %v912 = vtanh.pop %v856
      %v913 = vtanh.pop %v859
      %v914 = vtanh.pop %v864
      %v915 = vtanh.pop %v867
      %v916 = vtanh.pop %v872
      %v917 = vtanh.pop %v875
      %v918 = vtanh.pop %v880
      %v919 = vtanh.pop %v883
      %v920 = vtanh.pop %v888
      %v921 = vtanh.pop %v891
      %v922 = vtanh.pop %v896
      %v923 = vtanh.pop %v899
      %v924 = vtanh.pop %v904
      %v925 = vtanh.pop %v907
      %926 = vst.msk [vmem:[%s321] sm:$0xff] %vm557, %v910
      %927 = vst.msk [vmem:[%s321 + $0x8] sm:$0xff] %vm557, %v911
      %928 = vst.msk [vmem:[%s321 + $0x10] sm:$0xff] %vm557, %v912
      %929 = vst.msk [vmem:[%s321 + $0x18] sm:$0xff] %vm557, %v913
      %930 = vst.msk [vmem:[%s321 + $0x20] sm:$0xff] %vm557, %v914
      %931 = vst.msk [vmem:[%s321 + $0x28] sm:$0xff] %vm557, %v915
      %932 = vst.msk [vmem:[%s321 + $0x30] sm:$0xff] %vm557, %v916
      %933 = vst.msk [vmem:[%s321 + $0x38] sm:$0xff] %vm557, %v917
      %934 = vst.msk [vmem:[%s321 + $0x40] sm:$0xff] %vm557, %v918
      %935 = vst.msk [vmem:[%s321 + $0x48] sm:$0xff] %vm557, %v919
      %936 = vst.msk [vmem:[%s321 + $0x50] sm:$0xff] %vm557, %v920
      %937 = vst.msk [vmem:[%s321 + $0x58] sm:$0xff] %vm557, %v921
      %938 = vst.msk [vmem:[%s321 + $0x60] sm:$0xff] %vm557, %v922
      %939 = vst.msk [vmem:[%s321 + $0x68] sm:$0xff] %vm557, %v923
      %940 = vst.msk [vmem:[%s321 + $0x70] sm:$0xff] %vm557, %v924
      %941 = vst.msk [vmem:[%s321 + $0x78] sm:$0xff] %vm557, %v925
      %s942 = smul.u32 16, %s20
      %p943 = scmp.lt.s32.totalorder %s942, 31
      %s944 = scalar_select %p943, %s942, 31
      %s945 = smul.addr %s944, 8
      %s946 = scalar_lea.vmem %s7, %s945
      %s947 = smul.u32 16, %s20
      %p948 = scmp.lt.s32.totalorder %s947, 31
      %s949 = scalar_select %p948, %s947, 31
      %s950 = smul.addr %s949, 8
      %s951 = scalar_lea.vmem %s8, %s950
      // Predicated region
      $region49: #{tpu_custom_call.1} parent=47 // pred_check
        %p952 = pneg %p190
      $region50: #{tpu_custom_call.1} parent=47 // pred_check_branch
        %954 = sbr.rel (%p952) target = $region52
      $region51: #{tpu_custom_call.1} parent=47 // pred_region
        %s955 = smul.u32 16, %s20
      $region52: #{tpu_custom_call.1} parent=47 // pred_fallthru
        _
      // Predicated region
      $region53: #{tpu_custom_call.1} parent=47 // pred_check
        %p956 = pneg %p216
      $region54: #{tpu_custom_call.1} parent=47 // pred_check_branch
        %958 = sbr.rel (%p956) target = $region56
      $region55: #{tpu_custom_call.1} parent=47 // pred_region
        %s959 = smul.u32 16, %s20
      $region56: #{tpu_custom_call.1} parent=47 // pred_fallthru
        _
    $region48: #{tpu_custom_call.1} parent=5 // pred_fallthru
      _
    %p960 = scmp.le.s32.totalorder 2, %s15
    // Predicated region
    $region57: #{tpu_custom_call.1} parent=5 // pred_check
      %p961 = pneg %p960
    $region58: #{tpu_custom_call.1} parent=5 // pred_check_branch
      %963 = sbr.rel (%p961) target = $region60
    $region59: #{tpu_custom_call.1} parent=5 // pred_region
      %s964 = ssub.s32 %s15, 2
      // Predicated region
      $region61: #{tpu_custom_call.1} parent=59 // pred_check
        %p965 = pneg %p196
      $region62: #{tpu_custom_call.1} parent=59 // pred_check_branch
        %967 = sbr.rel (%p965) target = $region64
      $region63: #{tpu_custom_call.1} parent=59 // pred_region
        %s968 = smul.u32 16, %s21
        %p969 = scmp.lt.s32.totalorder %s968, 31
        %s970 = scalar_select %p969, %s968, 31
        %s971 = smul.addr %s970, 8
        %s972 = scalar_lea.vmem %s7, %s971
      $region64: #{tpu_custom_call.1} parent=59 // pred_fallthru
        _
      // Predicated region
      $region65: #{tpu_custom_call.1} parent=59 // pred_check
        %p973 = pneg %p222
      $region66: #{tpu_custom_call.1} parent=59 // pred_check_branch
        %975 = sbr.rel (%p973) target = $region68
      $region67: #{tpu_custom_call.1} parent=59 // pred_region
        %s976 = smul.u32 16, %s21
        %p977 = scmp.lt.s32.totalorder %s976, 31
        %s978 = scalar_select %p977, %s976, 31
        %s979 = smul.addr %s978, 8
        %s980 = scalar_lea.vmem %s8, %s979
      $region68: #{tpu_custom_call.1} parent=59 // pred_fallthru
        _
    $region60: #{tpu_custom_call.1} parent=5 // pred_fallthru
      _
  $region6: #{tpu_custom_call.1} parent=0 // loop_footer
    %s19 = sadd.s32 1, %s15
  $region7: #{tpu_custom_call.1} parent=0 // loop_footer_branch
    %14 = sbr.rel target = $region3
  $region8: #{tpu_custom_call.1} parent=0 // loop_exit
    _

</llo_original>
